<compile_context>
chip_gen: v6e
topology: v6e:2x2x1
jax: 0.10.0
libtpu: 0.0.40
codegen_flags: <defaults>
</compile_context>

<pallas_src>
import functools

import jax
import jax.numpy as jnp
from jax.experimental import pallas as pl
from jax.experimental.pallas import tpu as pltpu


def _round_up(n, m):
    return (n + m - 1) // m * m


def _reversible_block_kernel(x_ref, wf_ref, bf_ref, wg_ref, bg_ref, y_ref, *, d):
    # Fused (tm, 2D) tile: static slices give x1 / x2 without an extra HBM pass.
    x = x_ref[...]
    x1 = x[:, :d]
    x2 = x[:, d:]

    wf = wf_ref[...]
    wg = wg_ref[...]

    # y1 = x1 + f(x2), f = Linear(Wf, bf). MXU matmul, f32 accumulation.
    f_out = jnp.dot(x2, wf, preferred_element_type=jnp.float32)
    y1 = x1.astype(jnp.float32) + f_out + bf_ref[...]

    # y2 = x2 + g(y1), g = Linear(Wg, bg).
    g_out = jnp.dot(y1.astype(wg.dtype), wg, preferred_element_type=jnp.float32)
    y2 = x2.astype(jnp.float32) + g_out + bg_ref[...]

    # Single lane-dense store of the concatenated halves (== torch.cat dim=2).
    y_ref[...] = jnp.concatenate([y1, y2], axis=-1).astype(y_ref.dtype)


def reversible_block_forward(x, wf, bf, wg, bg, *, tm=512):
    """x: (B, S, 2*D). Returns (B, S, 2*D) = cat(x1 + f(x2), x2 + g(y1))."""
    B, S, twoD = x.shape
    D = twoD // 2
    M = B * S

    # Row tile: as large as possible (>=256 ideally) but never beyond the
    # sublane-padded row count; always a multiple of 8 (f32 sublane height).
    tm = max(8, min(tm, _round_up(M, 8)))
    Mp = _round_up(M, tm)

    # Flatten rows; pad the ragged tail instead of asserting divisibility.
    x2d = x.reshape(M, twoD)
    if Mp != M:
        x2d = jnp.pad(x2d, ((0, Mp - M), (0, 0)))

    bf2 = bf.reshape(1, D)
    bg2 = bg.reshape(1, D)

    grid = (Mp // tm,)

    dtype_bytes = jnp.dtype(x.dtype).itemsize
    cost = pl.CostEstimate(
        flops=2 * 2 * Mp * D * D,                       # two (Mp,D)x(D,D) matmuls
        transcendentals=0,
        bytes_accessed=(2 * Mp * twoD + 2 * D * D + 2 * D) * dtype_bytes,
    )

    kernel = functools.partial(_reversible_block_kernel, d=D)

    y = pl.pallas_call(
        kernel,
        out_shape=jax.ShapeDtypeStruct((Mp, twoD), x.dtype),
        grid_spec=pltpu.PrefetchScalarGridSpec(
            num_scalar_prefetch=0,
            grid=grid,
            in_specs=[
                pl.BlockSpec((tm, twoD), lambda i: (i, 0)),   # fused x tile
                pl.BlockSpec((D, D), lambda i: (0, 0)),       # Wf (resident)
                pl.BlockSpec((1, D), lambda i: (0, 0)),       # bf
                pl.BlockSpec((D, D), lambda i: (0, 0)),       # Wg (resident)
                pl.BlockSpec((1, D), lambda i: (0, 0)),       # bg
            ],
            out_specs=pl.BlockSpec((tm, twoD), lambda i: (i, 0)),
        ),
        compiler_params=pltpu.CompilerParams(
            dimension_semantics=("parallel",)),
        cost_estimate=cost,
    )(x2d, wf, bf2, wg, bg2)

    return y[:M].reshape(B, S, twoD)


def _reference_forward(x, wf, bf, wg, bg):
    B, S, twoD = x.shape
    D = twoD // 2
    x1, x2 = x[:, :, :D], x[:, :, D:]
    y1 = x1 + (x2 @ wf + bf)
    y2 = x2 + (y1 @ wg + bg)
    return jnp.concatenate([y1, y2], axis=2)


def _make_case(key, B, S, D):
    kx, kwf, kbf, kwg, kbg = jax.random.split(key, 5)
    x = jax.random.normal(kx, (B, S, 2 * D), dtype=jnp.float32)
    wf = jax.random.normal(kwf, (D, D), dtype=jnp.float32) * 0.02
    bf = jax.random.normal(kbf, (D,), dtype=jnp.float32) * 0.02
    wg = jax.random.normal(kwg, (D, D), dtype=jnp.float32) * 0.02
    bg = jax.random.normal(kbg, (D,), dtype=jnp.float32) * 0.02
    return x, wf, bf, wg, bg


if __name__ == "__main__":
    key = jax.random.PRNGKey(0)
    k1, k2 = jax.random.split(key)

    # Case 1: small canonical shapes: batch=2, seq=8, per-half hidden D=64
    # -> x is (2, 8, 128), lane-dense 128-wide fused output.
    x, wf, bf, wg, bg = _make_case(k1, B=2, S=8, D=64)
    out = reversible_block_forward(x, wf, bf, wg, bg)
    out = jax.block_until_ready(out)
    ref = _reference_forward(x, wf, bf, wg, bg)
    assert out.shape == x.shape
    assert jnp.allclose(out, ref, atol=1e-5, rtol=1e-5), "mismatch vs reference (case 1)"

    # Case 2: ragged row count (B*S not a multiple of the tile) exercises the
    # pad-and-slice path that replaced the hard divisibility assert.
    x, wf, bf, wg, bg = _make_case(k2, B=3, S=10, D=64)
    out = reversible_block_forward(x, wf, bf, wg, bg)
    out = jax.block_until_ready(out)
    ref = _reference_forward(x, wf, bf, wg, bg)
    assert out.shape == x.shape
    assert jnp.allclose(out, ref, atol=1e-5, rtol=1e-5), "mismatch vs reference (case 2)"

    print("KERNEL_OK")
</pallas_src>

<mosaic_0001>
module attributes {stable_mosaic.version = 11 : i64} {
  func.func @_reversible_block_kernel(%arg0: i32, %arg1: memref<16x128xf32, #tpu.memory_space<vmem>>, %arg2: memref<64x64xf32, #tpu.memory_space<vmem>>, %arg3: memref<1x64xf32, #tpu.memory_space<vmem>>, %arg4: memref<64x64xf32, #tpu.memory_space<vmem>>, %arg5: memref<1x64xf32, #tpu.memory_space<vmem>>, %arg6: memref<16x128xf32, #tpu.memory_space<vmem>>) attributes {dimension_semantics = [#tpu.dimension_semantics<parallel>], iteration_bounds = array<i64: 1>, scalar_prefetch = 0 : i64, scratch_operands = 0 : i64, tpu.core_type = #tpu.core_type<tc>, window_params = [{transform_indices = @transform_0, window_bounds = array<i64: 16, 128>}, {pipeline_mode = #tpu.pipeline_mode<synchronous>, transform_indices = @transform_1, window_bounds = array<i64: 64, 64>}, {pipeline_mode = #tpu.pipeline_mode<synchronous>, transform_indices = @transform_2, window_bounds = array<i64: 1, 64>}, {pipeline_mode = #tpu.pipeline_mode<synchronous>, transform_indices = @transform_3, window_bounds = array<i64: 64, 64>}, {pipeline_mode = #tpu.pipeline_mode<synchronous>, transform_indices = @transform_4, window_bounds = array<i64: 1, 64>}, {transform_indices = @transform_5, window_bounds = array<i64: 16, 128>}]} {
    %c0 = arith.constant 0 : index
    %c0_0 = arith.constant 0 : index
    %0 = vector.load %arg1[%c0, %c0_0] : memref<16x128xf32, #tpu.memory_space<vmem>>, vector<16x128xf32>
    %1 = vector.extract_strided_slice %0 {offsets = [0, 0], sizes = [16, 64], strides = [1, 1]} : vector<16x128xf32> to vector<16x64xf32>
    %2 = vector.extract_strided_slice %0 {offsets = [0, 64], sizes = [16, 64], strides = [1, 1]} : vector<16x128xf32> to vector<16x64xf32>
    %c0_1 = arith.constant 0 : index
    %c0_2 = arith.constant 0 : index
    %3 = vector.load %arg2[%c0_1, %c0_2] : memref<64x64xf32, #tpu.memory_space<vmem>>, vector<64x64xf32>
    %c0_3 = arith.constant 0 : index
    %c0_4 = arith.constant 0 : index
    %4 = vector.load %arg4[%c0_3, %c0_4] : memref<64x64xf32, #tpu.memory_space<vmem>>, vector<64x64xf32>
    %cst = arith.constant dense<0.000000e+00> : vector<16x64xf32>
    %5 = tpu.matmul %2, %3, %cst {dimension_numbers = #tpu.dot_dimension_numbers<[1], [0], [0], [1], [0, 0, 1, 1], [], []>} : vector<16x64xf32>, vector<64x64xf32>, vector<16x64xf32> -> vector<16x64xf32>
    %6 = arith.addf %1, %5 : vector<16x64xf32>
    %c0_5 = arith.constant 0 : index
    %c0_6 = arith.constant 0 : index
    %7 = vector.load %arg3[%c0_5, %c0_6] : memref<1x64xf32, #tpu.memory_space<vmem>>, vector<1x64xf32>
    %8 = vector.broadcast %7 : vector<1x64xf32> to vector<16x64xf32>
    %9 = arith.addf %6, %8 : vector<16x64xf32>
    %cst_7 = arith.constant dense<0.000000e+00> : vector<16x64xf32>
    %10 = tpu.matmul %9, %4, %cst_7 {dimension_numbers = #tpu.dot_dimension_numbers<[1], [0], [0], [1], [0, 0, 1, 1], [], []>} : vector<16x64xf32>, vector<64x64xf32>, vector<16x64xf32> -> vector<16x64xf32>
    %11 = arith.addf %2, %10 : vector<16x64xf32>
    %c0_8 = arith.constant 0 : index
    %c0_9 = arith.constant 0 : index
    %12 = vector.load %arg5[%c0_8, %c0_9] : memref<1x64xf32, #tpu.memory_space<vmem>>, vector<1x64xf32>
    %13 = vector.broadcast %12 : vector<1x64xf32> to vector<16x64xf32>
    %14 = arith.addf %11, %13 : vector<16x64xf32>
    %15 = tpu.concatenate %9, %14 in 1 : vector<16x64xf32>, vector<16x64xf32> -> vector<16x128xf32>
    %c0_10 = arith.constant 0 : index
    %c0_11 = arith.constant 0 : index
    %16 = vector.load %arg6[%c0_10, %c0_11] : memref<16x128xf32, #tpu.memory_space<vmem>>, vector<16x128xf32>
    tpu.vector_store %arg6[%c0_10, %c0_11], %15 {strides = array<i32>} : memref<16x128xf32, #tpu.memory_space<vmem>>, vector<16x128xf32>,
    return
  }
  func.func @transform_0(%arg0: i32) -> (i32, i32) {
    %c0_i32 = arith.constant 0 : i32
    %c0_i32_0 = arith.constant 0 : i32
    return %arg0, %c0_i32 : i32, i32
  }
  func.func @transform_1(%arg0: i32) -> (i32, i32) {
    %c0_i32 = arith.constant 0 : i32
    %c0_i32_0 = arith.constant 0 : i32
    %c0_i32_1 = arith.constant 0 : i32
    return %c0_i32, %c0_i32_0 : i32, i32
  }
  func.func @transform_2(%arg0: i32) -> (i32, i32) {
    %c0_i32 = arith.constant 0 : i32
    %c0_i32_0 = arith.constant 0 : i32
    %c0_i32_1 = arith.constant 0 : i32
    return %c0_i32, %c0_i32_0 : i32, i32
  }
  func.func @transform_3(%arg0: i32) -> (i32, i32) {
    %c0_i32 = arith.constant 0 : i32
    %c0_i32_0 = arith.constant 0 : i32
    %c0_i32_1 = arith.constant 0 : i32
    return %c0_i32, %c0_i32_0 : i32, i32
  }
  func.func @transform_4(%arg0: i32) -> (i32, i32) {
    %c0_i32 = arith.constant 0 : i32
    %c0_i32_0 = arith.constant 0 : i32
    %c0_i32_1 = arith.constant 0 : i32
    return %c0_i32, %c0_i32_0 : i32, i32
  }
  func.func @transform_5(%arg0: i32) -> (i32, i32) {
    %c0_i32 = arith.constant 0 : i32
    %c0_i32_0 = arith.constant 0 : i32
    return %arg0, %c0_i32 : i32, i32
  }
}

</mosaic_0001>

<llo_original>
// kernel: tpu_custom_call.1
$region0: #{tpu_custom_call.1}
  #allocation0 [shape = 'u32[]', space=smem, size = 0x4, offset = 0x4, fixed_abs, tag = 'smem constant byte address 0x4 - core index']
  #allocation1 [shape = 'u32[144,128]{1,0:T(1,128)}', space=vmem, size = 0x12000, scoped, tag = 'internal scratch']
  %s0 = inlined_call_operand.hbm [shape: f32[16,128], index: 0, kind: input, shape index: {}]
  %s1 = inlined_call_operand.hbm [shape: f32[64,64], index: 1, kind: input, shape index: {}]
  %s2 = inlined_call_operand.vmem [shape: f32[1,64], index: 2, kind: input, shape index: {}]
  %s3 = inlined_call_operand.hbm [shape: f32[64,64], index: 3, kind: input, shape index: {}]
  %s4 = inlined_call_operand.vmem [shape: f32[1,64], index: 4, kind: input, shape index: {}]
  %s5 = inlined_call_operand.hbm [shape: f32[16,128], index: 5, kind: output, shape index: {}]
  %s6 = sld [smem:[#allocation0]]
  $region42: #{tpu_custom_call.1} parent=0
    _
  %s8 = ssub.s32 1, %s6
  %s9 = scalar_select 0, %s8, %s6
  $region1: #{tpu_custom_call.1} parent=0
    #allocation2 [shape = 'u8[8192]{0}', space=vmem, size = 0x2000, scoped, tag = 'input window, operand 0, single buffered']
    #allocation3 [shape = 's32[1]{0}', space=sflag, size = 0x4, scoped, tag = 'scoped memory for tpu_custom_call.1']
    #allocation4 [shape = 's32[1]{0}', space=sflag, size = 0x4, scoped, tag = 'scoped memory for tpu_custom_call.1']
    #allocation5 [shape = 'u8[32768]{0}', space=vmem, size = 0x8000, scoped, tag = 'input window, operand 1, single buffered']
    #allocation6 [shape = 's32[1]{0}', space=sflag, size = 0x4, scoped, tag = 'scoped memory for tpu_custom_call.1']
    #allocation7 [shape = 'u8[32768]{0}', space=vmem, size = 0x8000, scoped, tag = 'input window, operand 3, single buffered']
    #allocation8 [shape = 'u8[8192]{0}', space=vmem, size = 0x2000, scoped, tag = 'output window, operand 0, single buffered']
    %10 = vsyncpa [#allocation3], 0
    %11 = vsyncpa [#allocation6], 0
    %12 = vsyncpa [#allocation4], 0
    // Predicated region
    $region2: #{tpu_custom_call.1} parent=1 // pred_check
      _
    $region3: #{tpu_custom_call.1} parent=1 // pred_check_branch
      %14 = sbr.rel (0) target = $region5
    $region4: #{tpu_custom_call.1} parent=1 // pred_region
      %s16 = ssub.s32 256, 256
      %17 = vsyncadd [#allocation3], %s16
      %s18 = sshll.u32 [#allocation2], 4
      %s19 = int_to_ptr.vmem [resolvable:$true] %s18
      %24 = dma.hbm_to_vmem [thread:$0]  %s0, 256, %s19, [#allocation3], 128, 128, 8
    $region5: #{tpu_custom_call.1} parent=1 // pred_fallthru
      _
    // Predicated region
    $region6: #{tpu_custom_call.1} parent=1 // pred_check
      _
    $region7: #{tpu_custom_call.1} parent=1 // pred_check_branch
      %26 = sbr.rel (0) target = $region9
    $region8: #{tpu_custom_call.1} parent=1 // pred_region
      %s28 = ssub.s32 1024, 1024
      %29 = vsyncadd [#allocation6], %s28
      %s30 = sshll.u32 [#allocation5], 4
      %s31 = int_to_ptr.vmem [resolvable:$true] %s30
      %36 = dma.hbm_to_vmem [thread:$0]  %s1, 1024, %s31, [#allocation6], 128, 128, 8
    $region9: #{tpu_custom_call.1} parent=1 // pred_fallthru
      _
    // Predicated region
    $region10: #{tpu_custom_call.1} parent=1 // pred_check
      _
    $region11: #{tpu_custom_call.1} parent=1 // pred_check_branch
      %38 = sbr.rel (0) target = $region13
    $region12: #{tpu_custom_call.1} parent=1 // pred_region
      _
    $region13: #{tpu_custom_call.1} parent=1 // pred_fallthru
      _
    // Predicated region
    $region14: #{tpu_custom_call.1} parent=1 // pred_check
      _
    $region15: #{tpu_custom_call.1} parent=1 // pred_check_branch
      %40 = sbr.rel (0) target = $region17
    $region16: #{tpu_custom_call.1} parent=1 // pred_region
      %s42 = ssub.s32 1024, 1024
      %43 = vsyncadd [#allocation6], %s42
      %s44 = sshll.u32 [#allocation7], 4
      %s45 = int_to_ptr.vmem [resolvable:$true] %s44
      %50 = dma.hbm_to_vmem [thread:$0]  %s3, 1024, %s45, [#allocation6], 128, 128, 8
    $region17: #{tpu_custom_call.1} parent=1 // pred_fallthru
      _
    // Predicated region
    $region18: #{tpu_custom_call.1} parent=1 // pred_check
      _
    $region19: #{tpu_custom_call.1} parent=1 // pred_check_branch
      %52 = sbr.rel (0) target = $region21
    $region20: #{tpu_custom_call.1} parent=1 // pred_region
      _
    $region21: #{tpu_custom_call.1} parent=1 // pred_fallthru
      _
    // Predicated region
    $region22: #{tpu_custom_call.1} parent=1 // pred_check
      _
    $region23: #{tpu_custom_call.1} parent=1 // pred_check_branch
      %54 = sbr.rel (0) target = $region25
    $region24: #{tpu_custom_call.1} parent=1 // pred_region
      %55 = dma.done [#allocation3], 256
    $region25: #{tpu_custom_call.1} parent=1 // pred_fallthru
      _
    // Predicated region
    $region26: #{tpu_custom_call.1} parent=1 // pred_check
      _
    $region27: #{tpu_custom_call.1} parent=1 // pred_check_branch
      %57 = sbr.rel (0) target = $region29
    $region28: #{tpu_custom_call.1} parent=1 // pred_region
      %58 = dma.done [#allocation6], 1024
    $region29: #{tpu_custom_call.1} parent=1 // pred_fallthru
      _
    // Predicated region
    $region30: #{tpu_custom_call.1} parent=1 // pred_check
      _
    $region31: #{tpu_custom_call.1} parent=1 // pred_check_branch
      %60 = sbr.rel (0) target = $region33
    $region32: #{tpu_custom_call.1} parent=1 // pred_region
      %61 = dma.done [#allocation6], 1024
    $region33: #{tpu_custom_call.1} parent=1 // pred_fallthru
      _
    %v62 = vld [vmem:[#allocation2] sm:$0xff]
    %v63 = vld [vmem:[#allocation2 + $0x8] sm:$0xff]
    %v64 = vld [vmem:[#allocation5] sm:$0xff]
    %v65 = vld [vmem:[#allocation5 + $0x8] sm:$0xff]
    %v66 = vld [vmem:[#allocation5 + $0x10] sm:$0xff]
    %v67 = vld [vmem:[#allocation5 + $0x18] sm:$0xff]
    %v68 = vld [vmem:[#allocation5 + $0x20] sm:$0xff]
    %v69 = vld [vmem:[#allocation5 + $0x28] sm:$0xff]
    %v70 = vld [vmem:[#allocation5 + $0x30] sm:$0xff]
    %v71 = vld [vmem:[#allocation5 + $0x38] sm:$0xff]
    %v72 = vld [vmem:[#allocation7] sm:$0xff]
    %v73 = vld [vmem:[#allocation7 + $0x8] sm:$0xff]
    %v74 = vld [vmem:[#allocation7 + $0x10] sm:$0xff]
    %v75 = vld [vmem:[#allocation7 + $0x18] sm:$0xff]
    %v76 = vld [vmem:[#allocation7 + $0x20] sm:$0xff]
    %v77 = vld [vmem:[#allocation7 + $0x28] sm:$0xff]
    %v78 = vld [vmem:[#allocation7 + $0x30] sm:$0xff]
    %v79 = vld [vmem:[#allocation7 + $0x38] sm:$0xff]
    %82 = vrot.lane.b32.xlu0 %v62, 64
    %v83 = vpop.permute.xlu0 %82
    %84 = vrot.lane.b32.xlu0 %v63, 64
    %v85 = vpop.permute.xlu0 %84
    %vm86 = vcmask 523264
    %v87 = vsel %vm86, %v83, 0
    %v89 = vsel %vm86, %v85, 0
    %91 = vmatprep.subr.mxu0 0.0
    %92 = vmatpush1.msra.mxu0 0.0
    %93 = vmatprep.subr.mxu0 0.0
    %94 = vmatpush1.msra.mxu0 0.0
    %95 = vmatprep.subr.mxu0 0.0
    %96 = vmatpush1.msra.mxu0 0.0
    %97 = vmatprep.subr.mxu0 0.0
    %98 = vmatpush1.msra.mxu0 0.0
    %99 = vmatprep.subr.mxu0 0.0
    %100 = vmatpush1.msra.mxu0 0.0
    %101 = vmatprep.subr.mxu0 0.0
    %102 = vmatpush1.msra.mxu0 0.0
    %103 = vmatprep.subr.mxu0 0.0
    %104 = vmatpush1.msra.mxu0 0.0
    %105 = vmatprep.subr.mxu0 0.0
    %106 = vmatpush1.msra.mxu0 0.0
    %107 = vmatprep.subr.mxu0 0.0
    %108 = vmatpush1.msra.mxu0 %v71
    %109 = vmatprep.subr.mxu0 0.0
    %110 = vmatpush1.msra.mxu0 %v70
    %111 = vmatprep.subr.mxu0 0.0
    %112 = vmatpush1.msra.mxu0 %v69
    %113 = vmatprep.subr.mxu0 0.0
    %114 = vmatpush1.msra.mxu0 %v68
    %115 = vmatprep.subr.mxu0 0.0
    %116 = vmatpush1.msra.mxu0 %v67
    %117 = vmatprep.subr.mxu0 0.0
    %118 = vmatpush1.msra.mxu0 %v66
    %119 = vmatprep.subr.mxu0 0.0
    %120 = vmatpush1.msra.mxu0 %v65
    %121 = vmatprep.subr.mxu0 0.0
    %122 = vmatpush1.msra.mxu0 %v64
    %123 = vmatprep.subr.mxu0 0.0
    %124 = vmatpush2.msra.mxu0 0.0
    %125 = vmatprep.subr.mxu0 0.0
    %126 = vmatpush2.msra.mxu0 0.0
    %127 = vmatprep.subr.mxu0 0.0
    %128 = vmatpush2.msra.mxu0 0.0
    %129 = vmatprep.subr.mxu0 0.0
    %130 = vmatpush2.msra.mxu0 0.0
    %131 = vmatprep.subr.mxu0 0.0
    %132 = vmatpush2.msra.mxu0 0.0
    %133 = vmatprep.subr.mxu0 0.0
    %134 = vmatpush2.msra.mxu0 0.0
    %135 = vmatprep.subr.mxu0 0.0
    %136 = vmatpush2.msra.mxu0 0.0
    %137 = vmatprep.subr.mxu0 0.0
    %138 = vmatpush2.msra.mxu0 0.0
    %139 = vmatprep.subr.mxu0 0.0
    %140 = vmatpush2.msra.mxu0 0.0
    %141 = vmatprep.subr.mxu0 0.0
    %142 = vmatpush2.msra.mxu0 0.0
    %143 = vmatprep.subr.mxu0 0.0
    %144 = vmatpush2.msra.mxu0 0.0
    %145 = vmatprep.subr.mxu0 0.0
    %146 = vmatpush2.msra.mxu0 0.0
    %147 = vmatprep.subr.mxu0 0.0
    %148 = vmatpush2.msra.mxu0 0.0
    %149 = vmatprep.subr.mxu0 0.0
    %150 = vmatpush2.msra.mxu0 0.0
    %151 = vmatprep.subr.mxu0 0.0
    %152 = vmatpush2.msra.mxu0 0.0
    %153 = vmatprep.subr.mxu0 0.0
    %154 = vmatpush2.msra.mxu0 0.0
    %155 = vmatprep.mubr.f32.mxu0 0.0
    %156 = vmatmul.mubr.f32.gmra.mxu0 %v87
    %v157 = vpop.f32.mrf.mxu0
    %v158 = vadd.f32 0.0, %v157
    %v159 = vpop.f32.mrf.mxu0
    %160 = vmatprep.mubr.f32.mxu0 0.0
    %161 = vmatmul.mubr.f32.gmra.mxu0 %v89
    %v162 = vpop.f32.mrf.mxu0
    %v163 = vadd.f32 0.0, %v162
    %v164 = vpop.f32.mrf.mxu0
    %165 = vdwg.mxu0
    %v166 = vadd.f32 %v62, %v158
    %v167 = vadd.f32 %v63, %v163
    %v168 = vld [vmem:[%s2] sm:$0x1]
    %v170 = vlaneseq
    %v171 = vshrl.u32 %v170, 7
    %v172 = vsub.s32 0, %v171
    %v173 = vrot.slane %v168, %v172
    %v175 = vadd.f32 %v166, %v173
    %v176 = vadd.f32 %v167, %v173
    %v178 = vsel %vm86, %v175, 0
    %v181 = vsel %vm86, %v176, 0
    %183 = vmatprep.subr.mxu0 0.0
    %184 = vmatpush1.msra.mxu0 0.0
    %185 = vmatprep.subr.mxu0 0.0
    %186 = vmatpush1.msra.mxu0 0.0
    %187 = vmatprep.subr.mxu0 0.0
    %188 = vmatpush1.msra.mxu0 0.0
    %189 = vmatprep.subr.mxu0 0.0
    %190 = vmatpush1.msra.mxu0 0.0
    %191 = vmatprep.subr.mxu0 0.0
    %192 = vmatpush1.msra.mxu0 0.0
    %193 = vmatprep.subr.mxu0 0.0
    %194 = vmatpush1.msra.mxu0 0.0
    %195 = vmatprep.subr.mxu0 0.0
    %196 = vmatpush1.msra.mxu0 0.0
    %197 = vmatprep.subr.mxu0 0.0
    %198 = vmatpush1.msra.mxu0 0.0
    %199 = vmatprep.subr.mxu0 0.0
    %200 = vmatpush1.msra.mxu0 %v79
    %201 = vmatprep.subr.mxu0 0.0
    %202 = vmatpush1.msra.mxu0 %v78
    %203 = vmatprep.subr.mxu0 0.0
    %204 = vmatpush1.msra.mxu0 %v77
    %205 = vmatprep.subr.mxu0 0.0
    %206 = vmatpush1.msra.mxu0 %v76
    %207 = vmatprep.subr.mxu0 0.0
    %208 = vmatpush1.msra.mxu0 %v75
    %209 = vmatprep.subr.mxu0 0.0
    %210 = vmatpush1.msra.mxu0 %v74
    %211 = vmatprep.subr.mxu0 0.0
    %212 = vmatpush1.msra.mxu0 %v73
    %213 = vmatprep.subr.mxu0 0.0
    %214 = vmatpush1.msra.mxu0 %v72
    %215 = vmatprep.subr.mxu0 0.0
    %216 = vmatpush2.msra.mxu0 0.0
    %217 = vmatprep.subr.mxu0 0.0
    %218 = vmatpush2.msra.mxu0 0.0
    %219 = vmatprep.subr.mxu0 0.0
    %220 = vmatpush2.msra.mxu0 0.0
    %221 = vmatprep.subr.mxu0 0.0
    %222 = vmatpush2.msra.mxu0 0.0
    %223 = vmatprep.subr.mxu0 0.0
    %224 = vmatpush2.msra.mxu0 0.0
    %225 = vmatprep.subr.mxu0 0.0
    %226 = vmatpush2.msra.mxu0 0.0
    %227 = vmatprep.subr.mxu0 0.0
    %228 = vmatpush2.msra.mxu0 0.0
    %229 = vmatprep.subr.mxu0 0.0
    %230 = vmatpush2.msra.mxu0 0.0
    %231 = vmatprep.subr.mxu0 0.0
    %232 = vmatpush2.msra.mxu0 0.0
    %233 = vmatprep.subr.mxu0 0.0
    %234 = vmatpush2.msra.mxu0 0.0
    %235 = vmatprep.subr.mxu0 0.0
    %236 = vmatpush2.msra.mxu0 0.0
    %237 = vmatprep.subr.mxu0 0.0
    %238 = vmatpush2.msra.mxu0 0.0
    %239 = vmatprep.subr.mxu0 0.0
    %240 = vmatpush2.msra.mxu0 0.0
    %241 = vmatprep.subr.mxu0 0.0
    %242 = vmatpush2.msra.mxu0 0.0
    %243 = vmatprep.subr.mxu0 0.0
    %244 = vmatpush2.msra.mxu0 0.0
    %245 = vmatprep.subr.mxu0 0.0
    %246 = vmatpush2.msra.mxu0 0.0
    %247 = vmatprep.mubr.f32.mxu0 0.0
    %248 = vmatmul.mubr.f32.gmra.mxu0 %v178
    %v249 = vpop.f32.mrf.mxu0
    %v250 = vadd.f32 0.0, %v249
    %v251 = vpop.f32.mrf.mxu0
    %252 = vmatprep.mubr.f32.mxu0 0.0
    %253 = vmatmul.mubr.f32.gmra.mxu0 %v181
    %v254 = vpop.f32.mrf.mxu0
    %v255 = vadd.f32 0.0, %v254
    %v256 = vpop.f32.mrf.mxu0
    %257 = vdwg.mxu0
    %260 = vrot.lane.b32.xlu0 %v250, 64
    %v261 = vpop.permute.xlu0 %260
    %262 = vrot.lane.b32.xlu0 %v255, 64
    %v263 = vpop.permute.xlu0 %262
    %v266 = vadd.f32 %v62, %v261
    %v267 = vadd.f32 %v63, %v263
    %v268 = vld [vmem:[%s4] sm:$0x1]
    %v270 = vlaneseq
    %v271 = vshrl.u32 %v270, 7
    %v272 = vsub.s32 0, %v271
    %v273 = vrot.slane %v268, %v272
    %274 = vrot.lane.b32.xlu0 %v273, 64
    %v275 = vpop.permute.xlu0 %274
    %v277 = vadd.f32 %v266, %v275
    %v278 = vadd.f32 %v267, %v275
    %v279 = vsel %vm86, %v175, %v277
    %v280 = vsel %vm86, %v176, %v278
    %281 = vst [vmem:[#allocation8] sm:$0xff] %v279
    %282 = vst [vmem:[#allocation8 + $0x8] sm:$0xff] %v280
    // Predicated region
    $region34: #{tpu_custom_call.1} parent=1 // pred_check
      _
    $region35: #{tpu_custom_call.1} parent=1 // pred_check_branch
      %284 = sbr.rel (0) target = $region37
    $region36: #{tpu_custom_call.1} parent=1 // pred_region
      %s286 = ssub.s32 256, 256
      %287 = vsyncadd [#allocation4], %s286
      %s288 = sshll.u32 [#allocation8], 4
      %s289 = int_to_ptr.vmem [resolvable:$true] %s288
      %294 = dma.vmem_to_hbm [thread:$0]  %s289, 256, %s5, [#allocation4], 128, 128, 8
    $region37: #{tpu_custom_call.1} parent=1 // pred_fallthru
      _
    // Predicated region
    $region38: #{tpu_custom_call.1} parent=1 // pred_check
      _
    $region39: #{tpu_custom_call.1} parent=1 // pred_check_branch
      %296 = sbr.rel (0) target = $region41
    $region40: #{tpu_custom_call.1} parent=1 // pred_region
      %297 = dma.done [#allocation4], 256
    $region41: #{tpu_custom_call.1} parent=1 // pred_fallthru
      _
    %298 = vsyncpa [#allocation3], 1
    %299 = vsyncpa [#allocation6], 1
    %300 = vsyncpa [#allocation4], 1

</llo_original>
